<compile_context>
chip_gen: v7x
topology: tpu7x:2x2x1
jax: 0.10.0
libtpu: 0.0.40
codegen_flags: <defaults>
</compile_context>

<pallas_src>
import jax
import jax.numpy as jnp
from jax.experimental import pallas as pl
from jax.experimental.pallas import tpu as pltpu


# ----------------------------------------------------------------------------
# Kernel 1: fused GRU step (gate order r, z, n — PyTorch convention).
# Outputs the new hidden state (f32) and the pre-concatenated bf16 activation
# xcat = [emb | h_new | ctx] consumed by the fc_out kernel.
# ----------------------------------------------------------------------------
def gru_xcat_kernel(emb_ref, ctx_ref, h_ref,
                    wi_e_ref, wi_c_ref, wh_ref,
                    b_i_ref, b_h_ref,
                    hnew_ref, xcat_ref):
    emb = emb_ref[...]                      # (Bp, E) f32
    ctx = ctx_ref[...]                      # (Bp, H) f32
    h = h_ref[...]                          # (Bp, H) f32
    H = h.shape[-1]

    # gi = [emb | ctx] @ W_i + b_ih   (concat replaced by partial sums)
    gi = (jnp.dot(emb.astype(jnp.bfloat16), wi_e_ref[...],
                  preferred_element_type=jnp.float32)
          + jnp.dot(ctx.astype(jnp.bfloat16), wi_c_ref[...],
                    preferred_element_type=jnp.float32)
          + b_i_ref[...])                   # (Bp, 3H) f32
    # gh = h @ W_h + b_hh
    gh = (jnp.dot(h.astype(jnp.bfloat16), wh_ref[...],
                  preferred_element_type=jnp.float32)
          + b_h_ref[...])                   # (Bp, 3H) f32

    # PyTorch GRU:
    #   r = sigmoid(gi_r + gh_r); z = sigmoid(gi_z + gh_z)
    #   n = tanh(gi_n + r * gh_n); h' = (1 - z) * n + z * h
    r = jax.nn.sigmoid(gi[:, :H] + gh[:, :H])
    z = jax.nn.sigmoid(gi[:, H:2 * H] + gh[:, H:2 * H])
    n = jnp.tanh(gi[:, 2 * H:] + r * gh[:, 2 * H:])
    h_new = (1.0 - z) * n + z * h           # (Bp, H) f32

    hnew_ref[...] = h_new
    xcat_ref[...] = jnp.concatenate([emb, h_new, ctx],
                                    axis=-1).astype(jnp.bfloat16)


# ----------------------------------------------------------------------------
# Kernel 2: fc_out projection, streamed over wide vocab tiles.
#   prediction_tile = xcat @ W_fc[:, tile] + b_fc[tile]   (one MXU pass / tile)
# ----------------------------------------------------------------------------
def fc_out_kernel(xcat_ref, wfc_ref, bfc_ref, pred_ref):
    pred_ref[...] = (jnp.dot(xcat_ref[...], wfc_ref[...],
                             preferred_element_type=jnp.float32)
                     + bfc_ref[...])


def _round_up(x, m):
    return ((x + m - 1) // m) * m


# ----------------------------------------------------------------------------
# Python wrapper (glue): embedding lookup, batch/vocab padding, two pallas_calls
# ----------------------------------------------------------------------------
def rnn_decoder_forward(inputs, hidden, context, params, *, teach_forcing=True):
    """
    inputs:  (B,) int32 token ids if teach_forcing else (1, B, E) embedded
    hidden:  (1, B, H) float32 previous GRU hidden
    context: (1, B, H) float32 encoder context
    returns: prediction (B, V) float32, new hidden (1, B, H) float32
    """
    if teach_forcing:
        emb = jnp.take(params["embedding"], inputs, axis=0).astype(jnp.float32)
    else:
        emb = inputs[0].astype(jnp.float32)
    # dropout: eval mode -> identity (see TODO at top)

    B, E = emb.shape
    H = hidden.shape[-1]
    V = params["b_fc"].shape[-1]
    K = E + 2 * H

    h0 = hidden[0]     # (B, H)
    ctx = context[0]   # (B, H)

    # Sublane-pad batch to a multiple of 8, minimum 16 (full bf16 sublane
    # packing).  Zero rows are dropped at the end.
    Bp = max(16, _round_up(B, 8))
    pad = Bp - B
    if pad:
        emb = jnp.pad(emb, ((0, pad), (0, 0)))
        h0 = jnp.pad(h0, ((0, pad), (0, 0)))
        ctx = jnp.pad(ctx, ((0, pad), (0, 0)))

    # ---------------- 1) GRU step (everything VMEM-resident, no grid) --------
    vmem = pl.BlockSpec(memory_space=pltpu.MemorySpace.VMEM)
    gru_cost = pl.CostEstimate(
        flops=int(2 * Bp * ((E + H) * 3 * H + H * 3 * H)),
        transcendentals=int(3 * Bp * H),
        bytes_accessed=int(2 * ((E + H) * 3 * H + H * 3 * H)
                           + 4 * (2 * 3 * H + Bp * (E + 4 * H))
                           + 2 * Bp * K),
    )
    h_new, xcat = pl.pallas_call(
        gru_xcat_kernel,
        out_shape=(jax.ShapeDtypeStruct((Bp, H), jnp.float32),
                   jax.ShapeDtypeStruct((Bp, K), jnp.bfloat16)),
        in_specs=[vmem] * 8,
        out_specs=(vmem, vmem),
        cost_estimate=gru_cost,
    )(emb, ctx, h0,
      params["w_i_emb"], params["w_i_ctx"], params["w_h"],
      params["b_i"], params["b_h"])

    # ---------------- 2) fc_out projection, tiled over the vocab -------------
    # Large lane-dense vocab tiles (multiple of 128); pad the vocab up to a
    # multiple of TN instead of collapsing to a single untile-able block, and
    # keep >= 2 tiles when possible so v7x megacore gets work on both cores.
    Vp0 = _round_up(V, 128)
    TN = min(1024, Vp0)
    if Vp0 > 128 and Vp0 // TN < 2:
        TN = max(128, _round_up(Vp0 // 2, 128))
    Vp = _round_up(Vp0, TN)
    nvt = Vp // TN

    w_fc = params["w_fc"]                   # (K, V) bf16
    b_fc = params["b_fc"]                   # (1, V) f32
    if Vp != V:
        # TODO(synk): in production, pre-pad W_fc/b_fc once at parameter setup.
        w_fc = jnp.pad(w_fc, ((0, 0), (0, Vp - V)))
        b_fc = jnp.pad(b_fc, ((0, 0), (0, Vp - V)))

    fc_cost = pl.CostEstimate(
        flops=int(2 * Bp * K * Vp),
        transcendentals=0,
        bytes_accessed=int(2 * K * Vp + 4 * Vp + 4 * Bp * Vp + 2 * Bp * K),
    )
    # VMEM budget: double-buffered weight/bias/output tiles + resident xcat.
    fc_vmem_bytes = int(2 * (K * TN * 2) + 2 * (Bp * TN * 4) + 2 * (TN * 4)
                        + Bp * K * 2 + (2 << 20))
    fc_vmem_bytes = min(max(fc_vmem_bytes, 4 << 20), 48 << 20)

    pred = pl.pallas_call(
        fc_out_kernel,
        grid=(nvt,),
        in_specs=[
            pl.BlockSpec((Bp, K), lambda j: (0, 0)),   # xcat (revisited block)
            pl.BlockSpec((K, TN), lambda j: (0, j)),   # W_fc vocab tile
            pl.BlockSpec((1, TN), lambda j: (0, j)),   # b_fc vocab tile
        ],
        out_specs=pl.BlockSpec((Bp, TN), lambda j: (0, j)),
        out_shape=jax.ShapeDtypeStruct((Bp, Vp), jnp.float32),
        compiler_params=pltpu.CompilerParams(
            dimension_semantics=("parallel",),
            vmem_limit_bytes=fc_vmem_bytes),
        cost_estimate=fc_cost,
    )(xcat, w_fc, b_fc)

    return pred[:B, :V], h_new[:B][None, :, :]


# ----------------------------------------------------------------------------
# Pure-JAX reference (same math, same bf16 weight quantization) for checking
# ----------------------------------------------------------------------------
def rnn_decoder_reference(tokens, hidden, context, params):
    emb = jnp.take(params["embedding"], tokens, axis=0).astype(jnp.float32)
    h = hidden[0]
    ctx = context[0]
    H = h.shape[-1]
    bf = lambda a: a.astype(jnp.bfloat16)

    gi = (jnp.dot(bf(emb), params["w_i_emb"], preferred_element_type=jnp.float32)
          + jnp.dot(bf(ctx), params["w_i_ctx"], preferred_element_type=jnp.float32)
          + params["b_i"])
    gh = (jnp.dot(bf(h), params["w_h"], preferred_element_type=jnp.float32)
          + params["b_h"])
    r = jax.nn.sigmoid(gi[:, :H] + gh[:, :H])
    z = jax.nn.sigmoid(gi[:, H:2 * H] + gh[:, H:2 * H])
    n = jnp.tanh(gi[:, 2 * H:] + r * gh[:, 2 * H:])
    h_new = (1.0 - z) * n + z * h

    xcat = jnp.concatenate([bf(emb), bf(h_new), bf(ctx)], axis=-1)
    pred = (jnp.dot(xcat, params["w_fc"], preferred_element_type=jnp.float32)
            + params["b_fc"])
    return pred, h_new[None]


# ----------------------------------------------------------------------------
# Deterministic parameter construction (weights pre-fused / pre-partitioned /
# pre-transposed to (in_features, out_features), matmul weights stored in bf16)
# ----------------------------------------------------------------------------
def make_params(key, output_dim, emb_dim, hid_dim):
    ks = jax.random.split(key, 6)
    E, H, V = emb_dim, hid_dim, output_dim
    scale = 1.0 / jnp.sqrt(hid_dim)
    u = lambda k, shape: jax.random.uniform(k, shape, jnp.float32, -scale, scale)

    # Fused GRU gate weights, gate order (r, z, n).
    w_i = u(ks[1], (E + H, 3 * H))      # input->hidden, x = [emb | ctx]
    w_h = u(ks[2], (H, 3 * H))          # hidden->hidden
    # fc_out: single (E + 2H, V) matrix consumed by the streamed fc kernel.
    w_fc = u(ks[3], (E + 2 * H, V))

    return {
        "embedding": jax.random.normal(ks[0], (V, E), jnp.float32),
        "w_i_emb": w_i[:E].astype(jnp.bfloat16),          # (E, 3H)
        "w_i_ctx": w_i[E:].astype(jnp.bfloat16),          # (H, 3H)
        "w_h": w_h.astype(jnp.bfloat16),                  # (H, 3H)
        "b_i": u(ks[4], (1, 3 * H)),                      # b_ih (r|z|n)
        "b_h": u(ks[5], (1, 3 * H)),                      # b_hh (r|z|n)
        "w_fc": w_fc.astype(jnp.bfloat16),                # (E+2H, V)
        "b_fc": jnp.zeros((1, V), jnp.float32),
    }


if __name__ == "__main__":
    # Small shapes implied by the module: batch B, emb E, hidden H, vocab V.
    B, E, H, V = 4, 16, 32, 256
    teach_forcing = True   # dropout=0.1 is eval-mode identity here

    key = jax.random.PRNGKey(0)
    kp, kt, kh, kc = jax.random.split(key, 4)

    params = make_params(kp, output_dim=V, emb_dim=E, hid_dim=H)

    tokens = jax.random.randint(kt, (B,), 0, V, dtype=jnp.int32)
    hidden = jax.random.normal(kh, (1, B, H), jnp.float32)
    context = jax.random.normal(kc, (1, B, H), jnp.float32)

    pred, h_new = rnn_decoder_forward(tokens, hidden, context, params,
                                      teach_forcing=teach_forcing)
    pred = jax.block_until_ready(pred)
    h_new = jax.block_until_ready(h_new)

    pred_ref, h_ref = rnn_decoder_reference(tokens, hidden, context, params)

    assert pred.shape == (B, V) and h_new.shape == (1, B, H)
    assert jnp.allclose(h_new, h_ref, atol=1e-3, rtol=1e-3), \
        float(jnp.max(jnp.abs(h_new - h_ref)))
    assert jnp.allclose(pred, pred_ref, atol=1e-3, rtol=1e-3), \
        float(jnp.max(jnp.abs(pred - pred_ref)))

    print("KERNEL_OK")
</pallas_src>

<mosaic_0001>
module attributes {stable_mosaic.version = 11 : i64} {
  func.func @gru_xcat_kernel(%arg0: memref<16x16xf32, #tpu.memory_space<vmem>>, %arg1: memref<16x32xf32, #tpu.memory_space<vmem>>, %arg2: memref<16x32xf32, #tpu.memory_space<vmem>>, %arg3: memref<16x96xbf16, #tpu.memory_space<vmem>>, %arg4: memref<32x96xbf16, #tpu.memory_space<vmem>>, %arg5: memref<32x96xbf16, #tpu.memory_space<vmem>>, %arg6: memref<1x96xf32, #tpu.memory_space<vmem>>, %arg7: memref<1x96xf32, #tpu.memory_space<vmem>>, %arg8: memref<16x32xf32, #tpu.memory_space<vmem>>, %arg9: memref<16x80xbf16, #tpu.memory_space<vmem>>) attributes {dimension_semantics = [], scalar_prefetch = 0 : i64, scratch_operands = 0 : i64, tpu.core_type = #tpu.core_type<tc>} {
    %c0 = arith.constant 0 : index
    %c0_0 = arith.constant 0 : index
    %0 = vector.load %arg0[%c0, %c0_0] : memref<16x16xf32, #tpu.memory_space<vmem>>, vector<16x16xf32>
    %c0_1 = arith.constant 0 : index
    %c0_2 = arith.constant 0 : index
    %1 = vector.load %arg1[%c0_1, %c0_2] : memref<16x32xf32, #tpu.memory_space<vmem>>, vector<16x32xf32>
    %c0_3 = arith.constant 0 : index
    %c0_4 = arith.constant 0 : index
    %2 = vector.load %arg2[%c0_3, %c0_4] : memref<16x32xf32, #tpu.memory_space<vmem>>, vector<16x32xf32>
    %3 = arith.truncf %0 : vector<16x16xf32> to vector<16x16xbf16>
    %c0_5 = arith.constant 0 : index
    %c0_6 = arith.constant 0 : index
    %4 = vector.load %arg3[%c0_5, %c0_6] : memref<16x96xbf16, #tpu.memory_space<vmem>>, vector<16x96xbf16>
    %cst = arith.constant dense<0.000000e+00> : vector<16x96xf32>
    %5 = tpu.matmul %3, %4, %cst {dimension_numbers = #tpu.dot_dimension_numbers<[1], [0], [0], [1], [0, 0, 1, 1], [], []>} : vector<16x16xbf16>, vector<16x96xbf16>, vector<16x96xf32> -> vector<16x96xf32>
    %6 = arith.truncf %1 : vector<16x32xf32> to vector<16x32xbf16>
    %c0_7 = arith.constant 0 : index
    %c0_8 = arith.constant 0 : index
    %7 = vector.load %arg4[%c0_7, %c0_8] : memref<32x96xbf16, #tpu.memory_space<vmem>>, vector<32x96xbf16>
    %cst_9 = arith.constant dense<0.000000e+00> : vector<16x96xf32>
    %8 = tpu.matmul %6, %7, %cst_9 {dimension_numbers = #tpu.dot_dimension_numbers<[1], [0], [0], [1], [0, 0, 1, 1], [], []>} : vector<16x32xbf16>, vector<32x96xbf16>, vector<16x96xf32> -> vector<16x96xf32>
    %9 = arith.addf %5, %8 : vector<16x96xf32>
    %c0_10 = arith.constant 0 : index
    %c0_11 = arith.constant 0 : index
    %10 = vector.load %arg6[%c0_10, %c0_11] : memref<1x96xf32, #tpu.memory_space<vmem>>, vector<1x96xf32>
    %11 = vector.broadcast %10 : vector<1x96xf32> to vector<16x96xf32>
    %12 = arith.addf %9, %11 : vector<16x96xf32>
    %13 = arith.truncf %2 : vector<16x32xf32> to vector<16x32xbf16>
    %c0_12 = arith.constant 0 : index
    %c0_13 = arith.constant 0 : index
    %14 = vector.load %arg5[%c0_12, %c0_13] : memref<32x96xbf16, #tpu.memory_space<vmem>>, vector<32x96xbf16>
    %cst_14 = arith.constant dense<0.000000e+00> : vector<16x96xf32>
    %15 = tpu.matmul %13, %14, %cst_14 {dimension_numbers = #tpu.dot_dimension_numbers<[1], [0], [0], [1], [0, 0, 1, 1], [], []>} : vector<16x32xbf16>, vector<32x96xbf16>, vector<16x96xf32> -> vector<16x96xf32>
    %c0_15 = arith.constant 0 : index
    %c0_16 = arith.constant 0 : index
    %16 = vector.load %arg7[%c0_15, %c0_16] : memref<1x96xf32, #tpu.memory_space<vmem>>, vector<1x96xf32>
    %17 = vector.broadcast %16 : vector<1x96xf32> to vector<16x96xf32>
    %18 = arith.addf %15, %17 : vector<16x96xf32>
    %19 = vector.extract_strided_slice %12 {offsets = [0, 0], sizes = [16, 32], strides = [1, 1]} : vector<16x96xf32> to vector<16x32xf32>
    %20 = vector.extract_strided_slice %18 {offsets = [0, 0], sizes = [16, 32], strides = [1, 1]} : vector<16x96xf32> to vector<16x32xf32>
    %21 = arith.addf %19, %20 : vector<16x32xf32>
    %22 = arith.negf %21 : vector<16x32xf32>
    %23 = math.exp %22 : vector<16x32xf32>
    %cst_17 = arith.constant 1.000000e+00 : f32
    %24 = vector.broadcast %cst_17 : f32 to vector<16x32xf32>
    %25 = arith.addf %24, %23 : vector<16x32xf32>
    %26 = arith.divf %24, %25 : vector<16x32xf32>
    %27 = vector.extract_strided_slice %12 {offsets = [0, 32], sizes = [16, 32], strides = [1, 1]} : vector<16x96xf32> to vector<16x32xf32>
    %28 = vector.extract_strided_slice %18 {offsets = [0, 32], sizes = [16, 32], strides = [1, 1]} : vector<16x96xf32> to vector<16x32xf32>
    %29 = arith.addf %27, %28 : vector<16x32xf32>
    %30 = arith.negf %29 : vector<16x32xf32>
    %31 = math.exp %30 : vector<16x32xf32>
    %cst_18 = arith.constant 1.000000e+00 : f32
    %32 = vector.broadcast %cst_18 : f32 to vector<16x32xf32>
    %33 = arith.addf %32, %31 : vector<16x32xf32>
    %34 = arith.divf %32, %33 : vector<16x32xf32>
    %35 = vector.extract_strided_slice %12 {offsets = [0, 64], sizes = [16, 32], strides = [1, 1]} : vector<16x96xf32> to vector<16x32xf32>
    %36 = vector.extract_strided_slice %18 {offsets = [0, 64], sizes = [16, 32], strides = [1, 1]} : vector<16x96xf32> to vector<16x32xf32>
    %37 = arith.mulf %26, %36 : vector<16x32xf32>
    %38 = arith.addf %35, %37 : vector<16x32xf32>
    %39 = math.tanh %38 : vector<16x32xf32>
    %cst_19 = arith.constant 1.000000e+00 : f32
    %40 = vector.broadcast %cst_19 : f32 to vector<16x32xf32>
    %41 = arith.subf %40, %34 : vector<16x32xf32>
    %42 = arith.mulf %41, %39 : vector<16x32xf32>
    %43 = arith.mulf %34, %2 : vector<16x32xf32>
    %44 = arith.addf %42, %43 : vector<16x32xf32>
    %c0_20 = arith.constant 0 : index
    %c0_21 = arith.constant 0 : index
    %45 = vector.load %arg8[%c0_20, %c0_21] : memref<16x32xf32, #tpu.memory_space<vmem>>, vector<16x32xf32>
    tpu.vector_store %arg8[%c0_20, %c0_21], %44 {strides = array<i32>} : memref<16x32xf32, #tpu.memory_space<vmem>>, vector<16x32xf32>,
    %46 = tpu.concatenate %0, %44, %1 in 1 : vector<16x16xf32>, vector<16x32xf32>, vector<16x32xf32> -> vector<16x80xf32>
    %47 = arith.truncf %46 : vector<16x80xf32> to vector<16x80xbf16>
    %c0_22 = arith.constant 0 : index
    %c0_23 = arith.constant 0 : index
    %48 = vector.load %arg9[%c0_22, %c0_23] : memref<16x80xbf16, #tpu.memory_space<vmem>>, vector<16x80xbf16>
    tpu.vector_store %arg9[%c0_22, %c0_23], %47 {strides = array<i32>} : memref<16x80xbf16, #tpu.memory_space<vmem>>, vector<16x80xbf16>,
    return
  }
}

</mosaic_0001>

<llo_original>
// kernel: tpu_custom_call.1
$region0: #{tpu_custom_call.1}
  #allocation0 [shape = 'u32[]', space=smem, size = 0x4, offset = 0x4, fixed_abs, tag = 'smem constant byte address 0x4 - core index']
  #allocation1 [shape = 'u32[144,128]{1,0:T(1,128)}', space=vmem, size = 0x12000, scoped, tag = 'internal scratch']
  %s0 = inlined_call_operand.hbm [shape: f32[16,16], index: 0, kind: input, shape index: {}]
  %s1 = inlined_call_operand.hbm [shape: f32[16,32], index: 1, kind: input, shape index: {}]
  %s2 = inlined_call_operand.hbm [shape: f32[16,32], index: 2, kind: input, shape index: {}]
  %s3 = inlined_call_operand.hbm [shape: bf16[16,96], index: 3, kind: input, shape index: {}]
  %s4 = inlined_call_operand.hbm [shape: bf16[32,96], index: 4, kind: input, shape index: {}]
  %s5 = inlined_call_operand.vmem [shape: bf16[32,96], index: 5, kind: input, shape index: {}]
  %s6 = inlined_call_operand.vmem [shape: f32[1,96], index: 6, kind: input, shape index: {}]
  %s7 = inlined_call_operand.vmem [shape: f32[1,96], index: 7, kind: input, shape index: {}]
  %s8 = inlined_call_operand.hbm [shape: f32[16,32], index: 8, kind: output, shape index: {0}]
  %s9 = inlined_call_operand.hbm [shape: bf16[16,80], index: 9, kind: output, shape index: {1}]
  %10 = xla_tuple %s8, %s9
  %s11 = sld [smem:[#allocation0]]
  $region70: #{tpu_custom_call.1} parent=0
    _
  %s13 = ssub.s32 1, %s11
  %s14 = scalar_select 0, %s13, %s11
  $region1: #{tpu_custom_call.1} parent=0
    #allocation2 [shape = 'u8[8192]{0}', space=vmem, size = 0x2000, scoped, tag = 'input window, operand 0, single buffered']
    #allocation3 [shape = 's32[1]{0}', space=sflag, size = 0x4, scoped, tag = 'scoped memory for tpu_custom_call.1']
    #allocation4 [shape = 's32[1]{0}', space=sflag, size = 0x4, scoped, tag = 'scoped memory for tpu_custom_call.1']
    #allocation5 [shape = 'u8[8192]{0}', space=vmem, size = 0x2000, scoped, tag = 'input window, operand 1, single buffered']
    #allocation6 [shape = 's32[1]{0}', space=sflag, size = 0x4, scoped, tag = 'scoped memory for tpu_custom_call.1']
    #allocation7 [shape = 'u8[8192]{0}', space=vmem, size = 0x2000, scoped, tag = 'input window, operand 2, single buffered']
    #allocation8 [shape = 'u8[4096]{0}', space=vmem, size = 0x1000, scoped, tag = 'input window, operand 3, single buffered']
    #allocation9 [shape = 's32[1]{0}', space=sflag, size = 0x4, scoped, tag = 'scoped memory for tpu_custom_call.1']
    #allocation10 [shape = 'u8[8192]{0}', space=vmem, size = 0x2000, scoped, tag = 'input window, operand 4, single buffered']
    #allocation11 [shape = 'u8[8192]{0}', space=vmem, size = 0x2000, scoped, tag = 'output window, operand 0, single buffered']
    #allocation12 [shape = 'u8[4096]{0}', space=vmem, size = 0x1000, scoped, tag = 'output window, operand 1, single buffered']
    #allocation13 [shape = 's32[1]{0}', space=sflag, size = 0x4, scoped, tag = 'scoped memory for tpu_custom_call.1']
    %15 = vsyncpa [#allocation3], 0
    %16 = vsyncpa [#allocation6], 0
    %17 = vsyncpa [#allocation9], 0
    %18 = vsyncpa [#allocation4], 0
    %19 = vsyncpa [#allocation13], 0
    // Predicated region
    $region2: #{tpu_custom_call.1} parent=1 // pred_check
      _
    $region3: #{tpu_custom_call.1} parent=1 // pred_check_branch
      %21 = sbr.rel (0) target = $region5
    $region4: #{tpu_custom_call.1} parent=1 // pred_region
      %s23 = ssub.s32 256, 256
      %24 = vsyncadd [#allocation3], %s23
      %s25 = sshll.u32 [#allocation2], 4
      %s26 = int_to_ptr.vmem [resolvable:$true] %s25
      %31 = dma.hbm_to_vmem [thread:$0]  %s0, 256, %s26, [#allocation3], 128, 128, 8
    $region5: #{tpu_custom_call.1} parent=1 // pred_fallthru
      _
    // Predicated region
    $region6: #{tpu_custom_call.1} parent=1 // pred_check
      _
    $region7: #{tpu_custom_call.1} parent=1 // pred_check_branch
      %33 = sbr.rel (0) target = $region9
    $region8: #{tpu_custom_call.1} parent=1 // pred_region
      %s35 = ssub.s32 256, 256
      %36 = vsyncadd [#allocation6], %s35
      %s37 = sshll.u32 [#allocation5], 4
      %s38 = int_to_ptr.vmem [resolvable:$true] %s37
      %43 = dma.hbm_to_vmem [thread:$0]  %s1, 256, %s38, [#allocation6], 128, 128, 8
    $region9: #{tpu_custom_call.1} parent=1 // pred_fallthru
      _
    // Predicated region
    $region10: #{tpu_custom_call.1} parent=1 // pred_check
      _
    $region11: #{tpu_custom_call.1} parent=1 // pred_check_branch
      %45 = sbr.rel (0) target = $region13
    $region12: #{tpu_custom_call.1} parent=1 // pred_region
      %s47 = ssub.s32 256, 256
      %48 = vsyncadd [#allocation6], %s47
      %s49 = sshll.u32 [#allocation7], 4
      %s50 = int_to_ptr.vmem [resolvable:$true] %s49
      %55 = dma.hbm_to_vmem [thread:$0]  %s2, 256, %s50, [#allocation6], 128, 128, 8
    $region13: #{tpu_custom_call.1} parent=1 // pred_fallthru
      _
    // Predicated region
    $region14: #{tpu_custom_call.1} parent=1 // pred_check
      _
    $region15: #{tpu_custom_call.1} parent=1 // pred_check_branch
      %57 = sbr.rel (0) target = $region17
    $region16: #{tpu_custom_call.1} parent=1 // pred_region
      %s59 = ssub.s32 128, 128
      %60 = vsyncadd [#allocation9], %s59
      %s61 = sshll.u32 [#allocation8], 4
      %s62 = int_to_ptr.vmem [resolvable:$true] %s61
      %67 = dma.hbm_to_vmem [thread:$0]  %s3, 128, %s62, [#allocation9], 64, 64, 4
    $region17: #{tpu_custom_call.1} parent=1 // pred_fallthru
      _
    // Predicated region
    $region18: #{tpu_custom_call.1} parent=1 // pred_check
      _
    $region19: #{tpu_custom_call.1} parent=1 // pred_check_branch
      %69 = sbr.rel (0) target = $region21
    $region20: #{tpu_custom_call.1} parent=1 // pred_region
      %s71 = ssub.s32 256, 256
      %72 = vsyncadd [#allocation9], %s71
      %s73 = sshll.u32 [#allocation10], 4
      %s74 = int_to_ptr.vmem [resolvable:$true] %s73
      %79 = dma.hbm_to_vmem [thread:$0]  %s4, 256, %s74, [#allocation9], 64, 64, 4
    $region21: #{tpu_custom_call.1} parent=1 // pred_fallthru
      _
    // Predicated region
    $region22: #{tpu_custom_call.1} parent=1 // pred_check
      _
    $region23: #{tpu_custom_call.1} parent=1 // pred_check_branch
      %81 = sbr.rel (0) target = $region25
    $region24: #{tpu_custom_call.1} parent=1 // pred_region
      _
    $region25: #{tpu_custom_call.1} parent=1 // pred_fallthru
      _
    // Predicated region
    $region26: #{tpu_custom_call.1} parent=1 // pred_check
      _
    $region27: #{tpu_custom_call.1} parent=1 // pred_check_branch
      %83 = sbr.rel (0) target = $region29
    $region28: #{tpu_custom_call.1} parent=1 // pred_region
      _
    $region29: #{tpu_custom_call.1} parent=1 // pred_fallthru
      _
    // Predicated region
    $region30: #{tpu_custom_call.1} parent=1 // pred_check
      _
    $region31: #{tpu_custom_call.1} parent=1 // pred_check_branch
      %85 = sbr.rel (0) target = $region33
    $region32: #{tpu_custom_call.1} parent=1 // pred_region
      _
    $region33: #{tpu_custom_call.1} parent=1 // pred_fallthru
      _
    // Predicated region
    $region34: #{tpu_custom_call.1} parent=1 // pred_check
      _
    $region35: #{tpu_custom_call.1} parent=1 // pred_check_branch
      %87 = sbr.rel (0) target = $region37
    $region36: #{tpu_custom_call.1} parent=1 // pred_region
      %88 = dma.done [#allocation3], 256
    $region37: #{tpu_custom_call.1} parent=1 // pred_fallthru
      _
    // Predicated region
    $region38: #{tpu_custom_call.1} parent=1 // pred_check
      _
    $region39: #{tpu_custom_call.1} parent=1 // pred_check_branch
      %90 = sbr.rel (0) target = $region41
    $region40: #{tpu_custom_call.1} parent=1 // pred_region
      %91 = dma.done [#allocation6], 256
    $region41: #{tpu_custom_call.1} parent=1 // pred_fallthru
      _
    // Predicated region
    $region42: #{tpu_custom_call.1} parent=1 // pred_check
      _
    $region43: #{tpu_custom_call.1} parent=1 // pred_check_branch
      %93 = sbr.rel (0) target = $region45
    $region44: #{tpu_custom_call.1} parent=1 // pred_region
      %94 = dma.done [#allocation6], 256
    $region45: #{tpu_custom_call.1} parent=1 // pred_fallthru
      _
    // Predicated region
    $region46: #{tpu_custom_call.1} parent=1 // pred_check
      _
    $region47: #{tpu_custom_call.1} parent=1 // pred_check_branch
      %96 = sbr.rel (0) target = $region49
    $region48: #{tpu_custom_call.1} parent=1 // pred_region
      %97 = dma.done [#allocation9], 128
    $region49: #{tpu_custom_call.1} parent=1 // pred_fallthru
      _
    // Predicated region
    $region50: #{tpu_custom_call.1} parent=1 // pred_check
      _
    $region51: #{tpu_custom_call.1} parent=1 // pred_check_branch
      %99 = sbr.rel (0) target = $region53
    $region52: #{tpu_custom_call.1} parent=1 // pred_region
      %100 = dma.done [#allocation9], 256
    $region53: #{tpu_custom_call.1} parent=1 // pred_fallthru
      _
    %v102 = vld [vmem:[#allocation2] sm:$0xff]
    %v103 = vld [vmem:[#allocation2 + $0x8] sm:$0xff]
    %v104 = vld [vmem:[#allocation5] sm:$0xff]
    %v105 = vld [vmem:[#allocation5 + $0x8] sm:$0xff]
    %v106 = vld [vmem:[#allocation7] sm:$0xff]
    %v107 = vld [vmem:[#allocation7 + $0x8] sm:$0xff]
    %v108 = vpack.c.bf16 %v103, %v102
    %v109 = vld [vmem:[#allocation8] sm:$0xf]
    %v110 = vld [vmem:[#allocation8 + $0x4] sm:$0xf]
    %v111 = vpack.c.bf16 %v105, %v104
    %v112 = vld [vmem:[#allocation10] sm:$0xf]
    %v113 = vld [vmem:[#allocation10 + $0x4] sm:$0xf]
    %v114 = vld [vmem:[#allocation10 + $0x8] sm:$0xf]
    %v115 = vld [vmem:[#allocation10 + $0xc] sm:$0xf]
    %v120 = vunpack.c.l.b16 %v112
    %v121 = vunpack.c.l.b16 %v113
    %v122 = vunpack.c.l.b16 %v114
    %v123 = vunpack.c.l.b16 %v115
    %v124 = vpack.c.b16 %v121, %v120
    %v125 = vpack.c.b16 %v123, %v122
    %vm128 = vcmask 261120
    %v130 = vsel %vm128, %v111, 0
    %132 = vmatprep.subr.bf16.mxu0 0
    %133 = vmatpush1.bf16.msra.mxu0 %v124
    %134 = vmatprep.subr.bf16.mxu0 0
    %135 = vmatpush1.bf16.msra.mxu0 %v125
    %136 = vmatprep.subr.bf16.mxu0 0
    %137 = vmatpush1.bf16.msra.mxu0 0
    %138 = vmatprep.subr.bf16.mxu0 0
    %139 = vmatpush1.bf16.msra.mxu0 0
    %140 = vmatprep.subr.bf16.mxu0 0
    %141 = vmatpush1.bf16.msra.mxu0 0
    %142 = vmatprep.subr.bf16.mxu0 0
    %143 = vmatpush1.bf16.msra.mxu0 0
    %144 = vmatprep.subr.bf16.mxu0 0
    %145 = vmatpush1.bf16.msra.mxu0 0
    %146 = vmatprep.subr.bf16.mxu0 0
    %147 = vmatpush1.bf16.msra.mxu0 0
    %148 = vmatprep.subr.bf16.mxu0 0
    %149 = vmatpush1.bf16.msra.mxu0 0
    %150 = vmatprep.subr.bf16.mxu0 0
    %151 = vmatpush1.bf16.msra.mxu0 0
    %152 = vmatprep.subr.bf16.mxu0 0
    %153 = vmatpush1.bf16.msra.mxu0 0
    %154 = vmatprep.subr.bf16.mxu0 0
    %155 = vmatpush1.bf16.msra.mxu0 0
    %156 = vmatprep.subr.bf16.mxu0 0
    %157 = vmatpush1.bf16.msra.mxu0 0
    %158 = vmatprep.subr.bf16.mxu0 0
    %159 = vmatpush1.bf16.msra.mxu0 0
    %160 = vmatprep.subr.bf16.mxu0 0
    %161 = vmatpush1.bf16.msra.mxu0 0
    %162 = vmatprep.subr.bf16.mxu0 0
    %163 = vmatpush1.bf16.msra.mxu0 0
    %164 = vmatprep.mubr.bf16.mxu0 0
    %165 = vmatmul.mubr.bf16.gmra.mrb[0].mxu0 %v130
    %v166 = vpop.f32.mrb[0].mxu0
    %v167 = vadd.f32 0.0, %v166
    %v168 = vpop.f32.mrb[0].mxu0
    %v169 = vpop.f32.mrb[0].mxu0
    %v170 = vadd.f32 0.0, %v169
    %v171 = vpop.f32.mrb[0].mxu0
    %172 = vdwg.mxu0
    %v175 = vunpack.c.l.b16 %v109
    %v176 = vunpack.c.l.b16 %v110
    %v177 = vpack.c.b16 %v176, %v175
    %vm179 = vcmask 130048
    %v181 = vsel %vm179, %v108, 0
    %183 = vmatprep.subr.bf16.mxu0 0
    %184 = vmatpush1.bf16.msra.mxu0 %v177
    %185 = vmatprep.subr.bf16.mxu0 0
    %186 = vmatpush1.bf16.msra.mxu0 0
    %187 = vmatprep.subr.bf16.mxu0 0
    %188 = vmatpush1.bf16.msra.mxu0 0
    %189 = vmatprep.subr.bf16.mxu0 0
    %190 = vmatpush1.bf16.msra.mxu0 0
    %191 = vmatprep.subr.bf16.mxu0 0
    %192 = vmatpush1.bf16.msra.mxu0 0
    %193 = vmatprep.subr.bf16.mxu0 0
    %194 = vmatpush1.bf16.msra.mxu0 0
    %195 = vmatprep.subr.bf16.mxu0 0
    %196 = vmatpush1.bf16.msra.mxu0 0
    %197 = vmatprep.subr.bf16.mxu0 0
    %198 = vmatpush1.bf16.msra.mxu0 0
    %199 = vmatprep.subr.bf16.mxu0 0
    %200 = vmatpush1.bf16.msra.mxu0 0
    %201 = vmatprep.subr.bf16.mxu0 0
    %202 = vmatpush1.bf16.msra.mxu0 0
    %203 = vmatprep.subr.bf16.mxu0 0
    %204 = vmatpush1.bf16.msra.mxu0 0
    %205 = vmatprep.subr.bf16.mxu0 0
    %206 = vmatpush1.bf16.msra.mxu0 0
    %207 = vmatprep.subr.bf16.mxu0 0
    %208 = vmatpush1.bf16.msra.mxu0 0
    %209 = vmatprep.subr.bf16.mxu0 0
    %210 = vmatpush1.bf16.msra.mxu0 0
    %211 = vmatprep.subr.bf16.mxu0 0
    %212 = vmatpush1.bf16.msra.mxu0 0
    %213 = vmatprep.subr.bf16.mxu0 0
    %214 = vmatpush1.bf16.msra.mxu0 0
    %215 = vmatprep.mubr.bf16.mxu0 0
    %216 = vmatmul.mubr.bf16.gmra.mrb[0].mxu0 %v181
    %v217 = vpop.f32.mrb[0].mxu0
    %v218 = vadd.f32 %v167, %v217
    %v219 = vpop.f32.mrb[0].mxu0
    %v220 = vpop.f32.mrb[0].mxu0
    %v221 = vadd.f32 %v170, %v220
    %v222 = vpop.f32.mrb[0].mxu0
    %223 = vdwg.mxu0
    %v224 = vld [vmem:[%s6] sm:$0x1]
    %v226 = vlaneseq
    %v227 = vshrl.u32 %v226, 7
    %v228 = vsub.s32 0, %v227
    %v229 = vrot.slane %v224, %v228
    %v231 = vadd.f32 %v218, %v229
    %v232 = vadd.f32 %v221, %v229
    %v233 = vpack.c.bf16 %v107, %v106
    %v234 = vld [vmem:[%s5] sm:$0xf]
    %v235 = vld [vmem:[%s5 + $0x4] sm:$0xf]
    %v236 = vld [vmem:[%s5 + $0x8] sm:$0xf]
    %v237 = vld [vmem:[%s5 + $0xc] sm:$0xf]
    %v238 = vld [vmem:[%s7] sm:$0x1]
    %v240 = vlaneseq
    %v241 = vshrl.u32 %v240, 7
    %v242 = vsub.s32 0, %v241
    %v243 = vrot.slane %v238, %v242
    %v249 = vunpack.c.l.b16 %v234
    %v250 = vunpack.c.l.b16 %v235
    %v251 = vunpack.c.l.b16 %v236
    %v252 = vunpack.c.l.b16 %v237
    %v253 = vpack.c.b16 %v250, %v249
    %v254 = vpack.c.b16 %v252, %v251
    %v258 = vsel %vm128, %v233, 0
    %260 = vmatprep.subr.bf16.mxu0 0
    %261 = vmatpush1.bf16.msra.mxu0 %v253
    %262 = vmatprep.subr.bf16.mxu0 0
    %263 = vmatpush1.bf16.msra.mxu0 %v254
    %264 = vmatprep.subr.bf16.mxu0 0
    %265 = vmatpush1.bf16.msra.mxu0 0
    %266 = vmatprep.subr.bf16.mxu0 0
    %267 = vmatpush1.bf16.msra.mxu0 0
    %268 = vmatprep.subr.bf16.mxu0 0
    %269 = vmatpush1.bf16.msra.mxu0 0
    %270 = vmatprep.subr.bf16.mxu0 0
    %271 = vmatpush1.bf16.msra.mxu0 0
    %272 = vmatprep.subr.bf16.mxu0 0
    %273 = vmatpush1.bf16.msra.mxu0 0
    %274 = vmatprep.subr.bf16.mxu0 0
    %275 = vmatpush1.bf16.msra.mxu0 0
    %276 = vmatprep.subr.bf16.mxu0 0
    %277 = vmatpush1.bf16.msra.mxu0 0
    %278 = vmatprep.subr.bf16.mxu0 0
    %279 = vmatpush1.bf16.msra.mxu0 0
    %280 = vmatprep.subr.bf16.mxu0 0
    %281 = vmatpush1.bf16.msra.mxu0 0
    %282 = vmatprep.subr.bf16.mxu0 0
    %283 = vmatpush1.bf16.msra.mxu0 0
    %284 = vmatprep.subr.bf16.mxu0 0
    %285 = vmatpush1.bf16.msra.mxu0 0
    %286 = vmatprep.subr.bf16.mxu0 0
    %287 = vmatpush1.bf16.msra.mxu0 0
    %288 = vmatprep.subr.bf16.mxu0 0
    %289 = vmatpush1.bf16.msra.mxu0 0
    %290 = vmatprep.subr.bf16.mxu0 0
    %291 = vmatpush1.bf16.msra.mxu0 0
    %292 = vmatprep.mubr.bf16.mxu0 0
    %293 = vmatmul.mubr.bf16.gmra.mrb[0].mxu0 %v258
    %v294 = vpop.f32.mrb[0].mxu0
    %v295 = vadd.f32 %v243, %v294
    %v296 = vpop.f32.mrb[0].mxu0
    %v297 = vpop.f32.mrb[0].mxu0
    %v298 = vadd.f32 %v243, %v297
    %v299 = vpop.f32.mrb[0].mxu0
    %300 = vdwg.mxu0
    %v301 = vadd.f32 %v231, %v295
    %v302 = vadd.f32 %v232, %v298
    %v303 = vxor.u32 %v301, 2147483648
    %v304 = vxor.u32 %v302, 2147483648
    %v305 = vmul.f32 %v303, 1.442695
    %v306 = vpow.pop %v305
    %v307 = vmul.f32 %v304, 1.442695
    %v308 = vpow.pop %v307
    %v309 = vadd.f32 %v306, 1.0
    %v310 = vadd.f32 %v308, 1.0
    %v311 = vrcp.pop %v309
    %v312 = vmul.f32 1.0, %v311
    %v313 = vrcp.pop %v310
    %v314 = vmul.f32 1.0, %v313
    %317 = vrot.lane.b32.xlu0 %v295, 64
    %v318 = vpop.permute.xlu0 %317
    %319 = vrot.lane.b32.xlu0 %v298, 64
    %v320 = vpop.permute.xlu0 %319
    %v323 = vmul.f32 %v312, %v318
    %v324 = vmul.f32 %v314, %v320
    %327 = vrot.lane.b32.xlu0 %v323, 64
    %v328 = vpop.permute.xlu0 %327
    %329 = vrot.lane.b32.xlu0 %v324, 64
    %v330 = vpop.permute.xlu0 %329
    %v333 = vadd.f32 %v231, %v328
    %v334 = vadd.f32 %v232, %v330
    %v335 = vtanh.pop %v333
    %v336 = vtanh.pop %v334
    %v337 = vsub.f32 1.0, %v312
    %v338 = vsub.f32 1.0, %v314
    %341 = vrot.lane.b32.xlu0 %v335, 96
    %v342 = vpop.permute.xlu0 %341
    %343 = vrot.lane.b32.xlu0 %v336, 96
    %v344 = vpop.permute.xlu0 %343
    %v347 = vmul.f32 %v337, %v342
    %v348 = vmul.f32 %v338, %v344
    %351 = vrot.lane.b32.xlu0 %v106, 32
    %v352 = vpop.permute.xlu0 %351
    %353 = vrot.lane.b32.xlu0 %v107, 32
    %v354 = vpop.permute.xlu0 %353
    %v357 = vmul.f32 %v312, %v352
    %v358 = vmul.f32 %v314, %v354
    %v359 = vadd.f32 %v347, %v357
    %v360 = vadd.f32 %v348, %v358
    %363 = vrot.lane.b32.xlu0 %v359, 96
    %v364 = vpop.permute.xlu0 %363
    %365 = vrot.lane.b32.xlu0 %v360, 96
    %v366 = vpop.permute.xlu0 %365
    %369 = vst.msk [vmem:[#allocation11] sm:$0xff] %vm128, %v364
    %370 = vst.msk [vmem:[#allocation11 + $0x8] sm:$0xff] %vm128, %v366
    %371 = vrot.lane.b32.xlu0 %v359, 112
    %v372 = vpop.permute.xlu0 %371
    %373 = vrot.lane.b32.xlu0 %v360, 112
    %v374 = vpop.permute.xlu0 %373
    %379 = vrot.lane.b32.xlu0 %v104, 48
    %v380 = vpop.permute.xlu0 %379
    %381 = vrot.lane.b32.xlu0 %v105, 48
    %v382 = vpop.permute.xlu0 %381
    %v385 = vsel %vm179, %v102, %v372
    %v386 = vsel %vm179, %v103, %v374
    %vm387 = vcmask 392192
    %v388 = vsel %vm387, %v385, %v380
    %v389 = vsel %vm387, %v386, %v382
    %v390 = vpack.c.bf16 %v389, %v388
    %v392 = vunpack.c.l.b16 %v390
    %v393 = vunpack.c.h.b16 %v390
    %v394 = vpack.c.b16 %v392, %v392
    %v395 = vpack.c.b16 %v393, %v393
    %vm398 = vcmask 650240
    %399 = vst.msk [vmem:[#allocation12] sm:$0xf] %vm398, %v394
    %400 = vst.msk [vmem:[#allocation12 + $0x4] sm:$0xf] %vm398, %v395
    // Predicated region
    $region54: #{tpu_custom_call.1} parent=1 // pred_check
      _
    $region55: #{tpu_custom_call.1} parent=1 // pred_check_branch
      %402 = sbr.rel (0) target = $region57
    $region56: #{tpu_custom_call.1} parent=1 // pred_region
      %s404 = ssub.s32 256, 256
      %405 = vsyncadd [#allocation4], %s404
      %s406 = sshll.u32 [#allocation11], 4
      %s407 = int_to_ptr.vmem [resolvable:$true] %s406
      %412 = dma.vmem_to_hbm [thread:$0]  %s407, 256, %s8, [#allocation4], 128, 128, 8
    $region57: #{tpu_custom_call.1} parent=1 // pred_fallthru
      _
    // Predicated region
    $region58: #{tpu_custom_call.1} parent=1 // pred_check
      _
    $region59: #{tpu_custom_call.1} parent=1 // pred_check_branch
      %414 = sbr.rel (0) target = $region61
    $region60: #{tpu_custom_call.1} parent=1 // pred_region
      %s416 = ssub.s32 128, 128
      %417 = vsyncadd [#allocation13], %s416
      %s418 = sshll.u32 [#allocation12], 4
      %s419 = int_to_ptr.vmem [resolvable:$true] %s418
      %424 = dma.vmem_to_hbm [thread:$0]  %s419, 128, %s9, [#allocation13], 64, 64, 4
    $region61: #{tpu_custom_call.1} parent=1 // pred_fallthru
      _
    // Predicated region
    $region62: #{tpu_custom_call.1} parent=1 // pred_check
      _
    $region63: #{tpu_custom_call.1} parent=1 // pred_check_branch
      %426 = sbr.rel (0) target = $region65
    $region64: #{tpu_custom_call.1} parent=1 // pred_region
      %427 = dma.done [#allocation4], 256
    $region65: #{tpu_custom_call.1} parent=1 // pred_fallthru
      _
    // Predicated region
    $region66: #{tpu_custom_call.1} parent=1 // pred_check
      _
    $region67: #{tpu_custom_call.1} parent=1 // pred_check_branch
      %429 = sbr.rel (0) target = $region69
    $region68: #{tpu_custom_call.1} parent=1 // pred_region
      %430 = dma.done [#allocation13], 128
    $region69: #{tpu_custom_call.1} parent=1 // pred_fallthru
      _
    %431 = vsyncpa [#allocation3], 1
    %432 = vsyncpa [#allocation6], 1
    %433 = vsyncpa [#allocation9], 1
    %434 = vsyncpa [#allocation4], 1
    %435 = vsyncpa [#allocation13], 1

</llo_original>
